<compile_context>
chip_gen: v5e
topology: v5e:2x2
jax: 0.10.0
libtpu: 0.0.40
codegen_flags: <defaults>
</compile_context>

<pallas_src>
import functools

import jax
import jax.numpy as jnp
from jax import lax
from jax.experimental import pallas as pl
from jax.experimental.pallas import tpu as pltpu

# Real (logical) sizes implied by the module.
B, IN_F, HID, LAT = 2, 6, 4, 2
# Padded (TPU lane/sublane aligned) sizes.
INP, HIDP, LATP = 128, 128, 128


def _round_up(n, m):
    return ((n + m - 1) // m) * m


def encoder_kernel(x_ref, w1_ref, b1_ref, w23_ref, b23_ref, eps_ref,
                   z_ref, elbo_ref, *, n_valid_rows, n_valid_cols, block_b):
    """One batch tile of the forward pass.

    x_ref    : (block_b, INP)      f32
    w1_ref   : (INP, HIDP)         f32   b1_ref  : (1, HIDP)
    w23_ref  : (HIDP, 2*LATP)      f32   b23_ref : (1, 2*LATP)   (w2||w3, b2||b3)
    eps_ref  : (block_b, LATP)     f32   pre-sampled N(0,1) noise
    z_ref    : (block_b, LATP)     f32   output, valid region [:B, :LAT]
    elbo_ref : (8, LATP)           f32   per-block ELBO partial (sublane-aligned)
    """
    x = x_ref[...]

    # linear1 + ReLU
    h = jnp.dot(x, w1_ref[...], preferred_element_type=jnp.float32) + b1_ref[...]
    x1 = jnp.maximum(h, 0.0)

    # fused linear2 || linear3 : one wide MXU pass.
    fused = (jnp.dot(x1, w23_ref[...], preferred_element_type=jnp.float32)
             + b23_ref[...])
    mu = fused[:, :LATP]           # 128-aligned static slices
    log_sigma = fused[:, LATP:]
    sigma = jnp.exp(log_sigma)

    # reparameterized sample
    z_ref[...] = mu + sigma * eps_ref[...]

    # ELBO partial: mask padded rows/cols, fold sublane groups of 8 together
    # so the per-block partial is an (8, 128) tile -> unmasked, lane-dense,
    # sublane-aligned store.  Wrapper finishes the scalar reduction.
    row = (lax.broadcasted_iota(jnp.int32, mu.shape, 0)
           + pl.program_id(0) * block_b)
    col = lax.broadcasted_iota(jnp.int32, mu.shape, 1)
    mask = (row < n_valid_rows) & (col < n_valid_cols)
    terms = jnp.where(mask, sigma * sigma + mu * mu - log_sigma - 0.5, 0.0)
    elbo_ref[...] = terms.reshape(block_b // 8, 8, terms.shape[-1]).sum(axis=0)


def _pad2d(a, rows, cols):
    a = jnp.asarray(a, jnp.float32)
    return jnp.pad(a, ((0, rows - a.shape[0]), (0, cols - a.shape[1])))


def init_params(key):
    """Deterministic synthetic parameters with the nn.Linear shapes."""
    k1, k2, k3, k4, k5, k6 = jax.random.split(key, 6)
    # stored as (in, out) so the kernel computes x @ W + b (== torch x @ W.T + b)
    w1 = jax.random.normal(k1, (IN_F, HID), jnp.float32) * 0.5
    b1 = jax.random.normal(k2, (HID,), jnp.float32) * 0.1
    w2 = jax.random.normal(k3, (HID, LAT), jnp.float32) * 0.5
    b2 = jax.random.normal(k4, (LAT,), jnp.float32) * 0.1
    w3 = jax.random.normal(k5, (HID, LAT), jnp.float32) * 0.5
    b3 = jax.random.normal(k6, (LAT,), jnp.float32) * 0.1
    return dict(w1=w1, b1=b1, w2=w2, b2=b2, w3=w3, b3=b3)


def prepare_params(params):
    """Pad + fuse weights ONCE (outside the hot path)."""
    w1_p = _pad2d(params["w1"], INP, HIDP)
    b1_p = _pad2d(params["b1"][None, :], 1, HIDP)
    # fused mu || log_sigma weight / bias: (HIDP, 2*LATP), (1, 2*LATP)
    w23 = jnp.zeros((HIDP, 2 * LATP), jnp.float32)
    w23 = w23.at[:HID, :LAT].set(jnp.asarray(params["w2"], jnp.float32))
    w23 = w23.at[:HID, LATP:LATP + LAT].set(jnp.asarray(params["w3"], jnp.float32))
    b23 = jnp.zeros((1, 2 * LATP), jnp.float32)
    b23 = b23.at[0, :LAT].set(jnp.asarray(params["b2"], jnp.float32))
    b23 = b23.at[0, LATP:LATP + LAT].set(jnp.asarray(params["b3"], jnp.float32))
    return dict(w1=w1_p, b1=b1_p, w23=w23, b23=b23)


@functools.partial(jax.jit, static_argnames=("n_valid", "block_b", "bpad"))
def _encoder_padded(xf, eps, w1_p, b1_p, w23_p, b23_p, *, n_valid, block_b, bpad):
    # Per-call padding of activations only (weights are pre-padded/resident).
    x_p = jnp.pad(xf, ((0, bpad - n_valid), (0, INP - xf.shape[1])))
    eps_p = jnp.pad(eps, ((0, bpad - n_valid), (0, LATP - eps.shape[1])))

    n_blocks = bpad // block_b
    kernel = functools.partial(encoder_kernel, n_valid_rows=n_valid,
                               n_valid_cols=LAT, block_b=block_b)

    z_pad, elbo_part = pl.pallas_call(
        kernel,
        out_shape=(
            jax.ShapeDtypeStruct((bpad, LATP), jnp.float32),
            jax.ShapeDtypeStruct((n_blocks * 8, LATP), jnp.float32),
        ),
        grid=(n_blocks,),
        in_specs=[
            pl.BlockSpec((block_b, INP), lambda i: (i, 0)),       # x
            pl.BlockSpec((INP, HIDP), lambda i: (0, 0)),          # w1
            pl.BlockSpec((1, HIDP), lambda i: (0, 0)),            # b1
            pl.BlockSpec((HIDP, 2 * LATP), lambda i: (0, 0)),     # w2||w3
            pl.BlockSpec((1, 2 * LATP), lambda i: (0, 0)),        # b2||b3
            pl.BlockSpec((block_b, LATP), lambda i: (i, 0)),      # eps
        ],
        out_specs=(
            pl.BlockSpec((block_b, LATP), lambda i: (i, 0)),      # z
            pl.BlockSpec((8, LATP), lambda i: (i, 0)),            # elbo partial
        ),
        compiler_params=pltpu.CompilerParams(
            dimension_semantics=("parallel",)),                   # v7x: 2 TCs
    )(x_p, w1_p, b1_p, w23_p, b23_p, eps_p)

    return z_pad, jnp.sum(elbo_part)


def encoder_forward(x, padded_params, eps):
    """x: any shape (B, ...) that flattens to (B, 6). Returns (z, elbo)."""
    b = x.shape[0]
    xf = x.reshape(b, -1).astype(jnp.float32)      # torch.flatten(x, 1)
    eps = jnp.asarray(eps, jnp.float32)
    # Batch tile: multiple of 8 sublanes, capped at 256 rows per grid step so
    # per-block VMEM stays tiny even on v7x's 64 MiB VMEM; large batches get
    # more (parallel) grid steps instead of bigger blocks.
    block_b = max(8, min(256, _round_up(b, 8)))
    bpad = _round_up(b, block_b)
    z_pad, elbo = _encoder_padded(
        xf, eps, padded_params["w1"], padded_params["b1"],
        padded_params["w23"], padded_params["b23"],
        n_valid=b, block_b=block_b, bpad=bpad)
    return z_pad[:b, :LAT], elbo


def encoder_reference(x, params, eps):
    """Plain-JAX reference mirroring the PyTorch forward."""
    xf = x.reshape(x.shape[0], -1).astype(jnp.float32)
    x1 = jax.nn.relu(xf @ params["w1"] + params["b1"])
    mu = x1 @ params["w2"] + params["b2"]
    sigma = jnp.exp(x1 @ params["w3"] + params["b3"])
    z = mu + sigma * eps
    elbo = jnp.sum(sigma ** 2 + mu ** 2 - jnp.log(sigma) - 0.5)
    return z, elbo


if __name__ == "__main__":
    key = jax.random.PRNGKey(0)
    k_param, k_x, k_eps = jax.random.split(key, 3)

    params = init_params(k_param)
    padded_params = prepare_params(params)          # pad/fuse once, hoisted

    # input flattens (start_dim=1) to (B, 6): use (2, 2, 3)
    x = jax.random.normal(k_x, (B, 2, 3), jnp.float32)
    # deterministic stand-in for torch.distributions.Normal(0,1).sample(mu.shape)
    eps = jax.random.normal(k_eps, (B, LAT), jnp.float32)

    z, elbo = encoder_forward(x, padded_params, eps)
    jax.block_until_ready((z, elbo))

    z_ref, elbo_ref = encoder_reference(x, params, eps)
    assert z.shape == (B, LAT)
    assert jnp.allclose(z, z_ref, atol=1e-5, rtol=1e-5)
    assert jnp.allclose(elbo, elbo_ref, atol=1e-4, rtol=1e-5)

    print("KERNEL_OK")
</pallas_src>

<mosaic_0001>
module attributes {stable_mosaic.version = 11 : i64} {
  func.func @encoder_kernel(%arg0: i32, %arg1: memref<8x128xf32, #tpu.memory_space<vmem>>, %arg2: memref<128x128xf32, #tpu.memory_space<vmem>>, %arg3: memref<1x128xf32, #tpu.memory_space<vmem>>, %arg4: memref<128x256xf32, #tpu.memory_space<vmem>>, %arg5: memref<1x256xf32, #tpu.memory_space<vmem>>, %arg6: memref<8x128xf32, #tpu.memory_space<vmem>>, %arg7: memref<8x128xf32, #tpu.memory_space<vmem>>, %arg8: memref<8x128xf32, #tpu.memory_space<vmem>>) attributes {dimension_semantics = [#tpu.dimension_semantics<parallel>], iteration_bounds = array<i64: 1>, scalar_prefetch = 0 : i64, scratch_operands = 0 : i64, tpu.core_type = #tpu.core_type<tc>, window_params = [{transform_indices = @transform_0, window_bounds = array<i64: 8, 128>}, {pipeline_mode = #tpu.pipeline_mode<synchronous>, transform_indices = @transform_1, window_bounds = array<i64: 128, 128>}, {pipeline_mode = #tpu.pipeline_mode<synchronous>, transform_indices = @transform_2, window_bounds = array<i64: 1, 128>}, {pipeline_mode = #tpu.pipeline_mode<synchronous>, transform_indices = @transform_3, window_bounds = array<i64: 128, 256>}, {pipeline_mode = #tpu.pipeline_mode<synchronous>, transform_indices = @transform_4, window_bounds = array<i64: 1, 256>}, {transform_indices = @transform_5, window_bounds = array<i64: 8, 128>}, {transform_indices = @transform_6, window_bounds = array<i64: 8, 128>}, {transform_indices = @transform_7, window_bounds = array<i64: 8, 128>}]} {
    %c0 = arith.constant 0 : index
    %c0_0 = arith.constant 0 : index
    %0 = vector.load %arg1[%c0, %c0_0] : memref<8x128xf32, #tpu.memory_space<vmem>>, vector<8x128xf32>
    %c0_1 = arith.constant 0 : index
    %c0_2 = arith.constant 0 : index
    %1 = vector.load %arg2[%c0_1, %c0_2] : memref<128x128xf32, #tpu.memory_space<vmem>>, vector<128x128xf32>
    %cst = arith.constant dense<0.000000e+00> : vector<8x128xf32>
    %2 = tpu.matmul %0, %1, %cst {dimension_numbers = #tpu.dot_dimension_numbers<[1], [0], [0], [1], [0, 0, 1, 1], [], []>} : vector<8x128xf32>, vector<128x128xf32>, vector<8x128xf32> -> vector<8x128xf32>
    %c0_3 = arith.constant 0 : index
    %c0_4 = arith.constant 0 : index
    %3 = vector.load %arg3[%c0_3, %c0_4] : memref<1x128xf32, #tpu.memory_space<vmem>>, vector<1x128xf32>
    %4 = vector.broadcast %3 : vector<1x128xf32> to vector<8x128xf32>
    %5 = arith.addf %2, %4 : vector<8x128xf32>
    %cst_5 = arith.constant 0.000000e+00 : f32
    %6 = vector.broadcast %cst_5 : f32 to vector<8x128xf32>
    %7 = arith.maximumf %5, %6 : vector<8x128xf32>
    %c0_6 = arith.constant 0 : index
    %c0_7 = arith.constant 0 : index
    %8 = vector.load %arg4[%c0_6, %c0_7] : memref<128x256xf32, #tpu.memory_space<vmem>>, vector<128x256xf32>
    %cst_8 = arith.constant dense<0.000000e+00> : vector<8x256xf32>
    %9 = tpu.matmul %7, %8, %cst_8 {dimension_numbers = #tpu.dot_dimension_numbers<[1], [0], [0], [1], [0, 0, 1, 1], [], []>} : vector<8x128xf32>, vector<128x256xf32>, vector<8x256xf32> -> vector<8x256xf32>
    %c0_9 = arith.constant 0 : index
    %c0_10 = arith.constant 0 : index
    %10 = vector.load %arg5[%c0_9, %c0_10] : memref<1x256xf32, #tpu.memory_space<vmem>>, vector<1x256xf32>
    %11 = vector.broadcast %10 : vector<1x256xf32> to vector<8x256xf32>
    %12 = arith.addf %9, %11 : vector<8x256xf32>
    %13 = vector.extract_strided_slice %12 {offsets = [0, 0], sizes = [8, 128], strides = [1, 1]} : vector<8x256xf32> to vector<8x128xf32>
    %14 = vector.extract_strided_slice %12 {offsets = [0, 128], sizes = [8, 128], strides = [1, 1]} : vector<8x256xf32> to vector<8x128xf32>
    %15 = math.exp %14 : vector<8x128xf32>
    %c0_11 = arith.constant 0 : index
    %c0_12 = arith.constant 0 : index
    %16 = vector.load %arg6[%c0_11, %c0_12] : memref<8x128xf32, #tpu.memory_space<vmem>>, vector<8x128xf32>
    %17 = arith.mulf %15, %16 : vector<8x128xf32>
    %18 = arith.addf %13, %17 : vector<8x128xf32>
    %c0_13 = arith.constant 0 : index
    %c0_14 = arith.constant 0 : index
    %19 = vector.load %arg7[%c0_13, %c0_14] : memref<8x128xf32, #tpu.memory_space<vmem>>, vector<8x128xf32>
    tpu.vector_store %arg7[%c0_13, %c0_14], %18 {strides = array<i32>} : memref<8x128xf32, #tpu.memory_space<vmem>>, vector<8x128xf32>,
    %20 = tpu.iota {dimensions = array<i32: 0>} : vector<8x128xi32>
    %c8_i32 = arith.constant 8 : i32
    %21 = arith.muli %arg0, %c8_i32 : i32
    %22 = vector.broadcast %21 : i32 to vector<8x128xi32>
    %23 = arith.addi %20, %22 : vector<8x128xi32>
    %24 = tpu.iota {dimensions = array<i32: 1>} : vector<8x128xi32>
    %c2_i32 = arith.constant 2 : i32
    %25 = vector.broadcast %c2_i32 : i32 to vector<8x128xi32>
    %26 = arith.cmpi slt, %23, %25 : vector<8x128xi32>
    %c2_i32_15 = arith.constant 2 : i32
    %27 = vector.broadcast %c2_i32_15 : i32 to vector<8x128xi32>
    %28 = arith.cmpi slt, %24, %27 : vector<8x128xi32>
    %29 = arith.andi %26, %28 : vector<8x128xi1>
    %30 = arith.mulf %15, %15 : vector<8x128xf32>
    %31 = arith.mulf %13, %13 : vector<8x128xf32>
    %32 = arith.addf %30, %31 : vector<8x128xf32>
    %33 = arith.subf %32, %14 : vector<8x128xf32>
    %cst_16 = arith.constant 5.000000e-01 : f32
    %34 = vector.broadcast %cst_16 : f32 to vector<8x128xf32>
    %35 = arith.subf %33, %34 : vector<8x128xf32>
    %cst_17 = arith.constant 0.000000e+00 : f32
    %36 = vector.broadcast %cst_17 : f32 to vector<8x128xf32>
    %37 = arith.select %29, %35, %36 : vector<8x128xi1>, vector<8x128xf32>
    %38 = vector.shape_cast %37 : vector<8x128xf32> to vector<1x8x128xf32>
    %cst_18 = arith.constant dense<0.000000e+00> : vector<8x128xf32>
    %39 = vector.multi_reduction <add>, %38, %cst_18 [0] : vector<1x8x128xf32> to vector<8x128xf32>
    %c0_19 = arith.constant 0 : index
    %c0_20 = arith.constant 0 : index
    %40 = vector.load %arg8[%c0_19, %c0_20] : memref<8x128xf32, #tpu.memory_space<vmem>>, vector<8x128xf32>
    tpu.vector_store %arg8[%c0_19, %c0_20], %39 {strides = array<i32>} : memref<8x128xf32, #tpu.memory_space<vmem>>, vector<8x128xf32>,
    return
  }
  func.func @transform_0(%arg0: i32) -> (i32, i32) {
    %c0_i32 = arith.constant 0 : i32
    %c0_i32_0 = arith.constant 0 : i32
    return %arg0, %c0_i32 : i32, i32
  }
  func.func @transform_1(%arg0: i32) -> (i32, i32) {
    %c0_i32 = arith.constant 0 : i32
    %c0_i32_0 = arith.constant 0 : i32
    %c0_i32_1 = arith.constant 0 : i32
    return %c0_i32, %c0_i32_0 : i32, i32
  }
  func.func @transform_2(%arg0: i32) -> (i32, i32) {
    %c0_i32 = arith.constant 0 : i32
    %c0_i32_0 = arith.constant 0 : i32
    %c0_i32_1 = arith.constant 0 : i32
    return %c0_i32, %c0_i32_0 : i32, i32
  }
  func.func @transform_3(%arg0: i32) -> (i32, i32) {
    %c0_i32 = arith.constant 0 : i32
    %c0_i32_0 = arith.constant 0 : i32
    %c0_i32_1 = arith.constant 0 : i32
    return %c0_i32, %c0_i32_0 : i32, i32
  }
  func.func @transform_4(%arg0: i32) -> (i32, i32) {
    %c0_i32 = arith.constant 0 : i32
    %c0_i32_0 = arith.constant 0 : i32
    %c0_i32_1 = arith.constant 0 : i32
    return %c0_i32, %c0_i32_0 : i32, i32
  }
  func.func @transform_5(%arg0: i32) -> (i32, i32) {
    %c0_i32 = arith.constant 0 : i32
    %c0_i32_0 = arith.constant 0 : i32
    return %arg0, %c0_i32 : i32, i32
  }
  func.func @transform_6(%arg0: i32) -> (i32, i32) {
    %c0_i32 = arith.constant 0 : i32
    %c0_i32_0 = arith.constant 0 : i32
    return %arg0, %c0_i32 : i32, i32
  }
  func.func @transform_7(%arg0: i32) -> (i32, i32) {
    %c0_i32 = arith.constant 0 : i32
    %c0_i32_0 = arith.constant 0 : i32
    return %arg0, %c0_i32 : i32, i32
  }
}

</mosaic_0001>

<llo_original>
// kernel: _encoder_padded.1
$region0: #{_encoder_padded.1}
  #allocation0 [shape = 'u32[]', space=smem, size = 0x4, offset = 0x4, fixed_abs, tag = 'smem constant byte address 0x4 - core index']
  #allocation1 [shape = 'u32[72,128]{1,0:T(1,128)}', space=vmem, size = 0x9000, scoped, tag = 'internal scratch']
  %s0 = inlined_call_operand.vmem [shape: f32[8,128], index: 0, kind: input, shape index: {}]
  %s1 = inlined_call_operand.hbm [shape: f32[128,128], index: 1, kind: input, shape index: {}]
  %s2 = inlined_call_operand.vmem [shape: f32[1,128], index: 2, kind: input, shape index: {}]
  %s3 = inlined_call_operand.hbm [shape: f32[128,256], index: 3, kind: input, shape index: {}]
  %s4 = inlined_call_operand.vmem [shape: f32[1,256], index: 4, kind: input, shape index: {}]
  %s5 = inlined_call_operand.vmem [shape: f32[8,128], index: 5, kind: input, shape index: {}]
  %s6 = inlined_call_operand.hbm [shape: f32[8,128], index: 6, kind: output, shape index: {0}]
  %s7 = inlined_call_operand.vmem [shape: f32[8,128], index: 7, kind: output, shape index: {1}]
  %8 = xla_tuple %s6, %s7
  %s9 = sld [smem:[#allocation0]]
  $region50: #{_encoder_padded.1} parent=0
    _
  %s11 = ssub.s32 1, %s9
  %s12 = scalar_select 0, %s11, %s9
  $region1: #{_encoder_padded.1} parent=0
    #allocation2 [shape = 'u8[65536]{0}', space=vmem, size = 0x10000, scoped, tag = 'input window, operand 1, single buffered']
    #allocation3 [shape = 's32[1]{0}', space=sflag, size = 0x4, scoped, tag = 'scoped memory for _encoder_padded.1']
    #allocation4 [shape = 's32[1]{0}', space=sflag, size = 0x4, scoped, tag = 'scoped memory for _encoder_padded.1']
    #allocation5 [shape = 'u8[131072]{0}', space=vmem, size = 0x20000, scoped, tag = 'input window, operand 3, single buffered']
    #allocation6 [shape = 's32[1]{0}', space=sflag, size = 0x4, scoped, tag = 'scoped memory for _encoder_padded.1']
    #allocation7 [shape = 'u8[4096]{0}', space=vmem, size = 0x1000, scoped, tag = 'output window, operand 0, single buffered']
    %13 = vsyncpa [#allocation3], 0
    %14 = vsyncpa [#allocation6], 0
    %15 = vsyncpa [#allocation4], 0
    // Predicated region
    $region2: #{_encoder_padded.1} parent=1 // pred_check
      _
    $region3: #{_encoder_padded.1} parent=1 // pred_check_branch
      %17 = sbr.rel (0) target = $region5
    $region4: #{_encoder_padded.1} parent=1 // pred_region
      _
    $region5: #{_encoder_padded.1} parent=1 // pred_fallthru
      _
    // Predicated region
    $region6: #{_encoder_padded.1} parent=1 // pred_check
      _
    $region7: #{_encoder_padded.1} parent=1 // pred_check_branch
      %19 = sbr.rel (0) target = $region9
    $region8: #{_encoder_padded.1} parent=1 // pred_region
      %21 = vsyncadd [#allocation3], 0
      %s22 = sshll.u32 %s1, 4
      %s23 = int_to_ptr.hbm [resolvable:$true] %s22
      %s24 = sshll.u32 [#allocation2], 4
      %s25 = int_to_ptr.vmem [resolvable:$true] %s24
      %30 = dma.hbm_to_vmem [thread:$0]  %s23, 2048, %s25, [#allocation3], 128, 128, 8
    $region9: #{_encoder_padded.1} parent=1 // pred_fallthru
      _
    // Predicated region
    $region10: #{_encoder_padded.1} parent=1 // pred_check
      _
    $region11: #{_encoder_padded.1} parent=1 // pred_check_branch
      %32 = sbr.rel (0) target = $region13
    $region12: #{_encoder_padded.1} parent=1 // pred_region
      _
    $region13: #{_encoder_padded.1} parent=1 // pred_fallthru
      _
    // Predicated region
    $region14: #{_encoder_padded.1} parent=1 // pred_check
      _
    $region15: #{_encoder_padded.1} parent=1 // pred_check_branch
      %34 = sbr.rel (0) target = $region17
    $region16: #{_encoder_padded.1} parent=1 // pred_region
      %36 = vsyncadd [#allocation6], 0
      %s37 = sshll.u32 %s3, 4
      %s38 = int_to_ptr.hbm [resolvable:$true] %s37
      %s39 = sshll.u32 [#allocation5], 4
      %s40 = int_to_ptr.vmem [resolvable:$true] %s39
      %45 = dma.hbm_to_vmem [thread:$0]  %s38, 4096, %s40, [#allocation6], 256, 256, 16
    $region17: #{_encoder_padded.1} parent=1 // pred_fallthru
      _
    // Predicated region
    $region18: #{_encoder_padded.1} parent=1 // pred_check
      _
    $region19: #{_encoder_padded.1} parent=1 // pred_check_branch
      %47 = sbr.rel (0) target = $region21
    $region20: #{_encoder_padded.1} parent=1 // pred_region
      _
    $region21: #{_encoder_padded.1} parent=1 // pred_fallthru
      _
    // Predicated region
    $region22: #{_encoder_padded.1} parent=1 // pred_check
      _
    $region23: #{_encoder_padded.1} parent=1 // pred_check_branch
      %49 = sbr.rel (0) target = $region25
    $region24: #{_encoder_padded.1} parent=1 // pred_region
      _
    $region25: #{_encoder_padded.1} parent=1 // pred_fallthru
      _
    // Predicated region
    $region26: #{_encoder_padded.1} parent=1 // pred_check
      _
    $region27: #{_encoder_padded.1} parent=1 // pred_check_branch
      %51 = sbr.rel (0) target = $region29
    $region28: #{_encoder_padded.1} parent=1 // pred_region
      %53 = dma.done [#allocation3], 2048
    $region29: #{_encoder_padded.1} parent=1 // pred_fallthru
      _
    // Predicated region
    $region30: #{_encoder_padded.1} parent=1 // pred_check
      _
    $region31: #{_encoder_padded.1} parent=1 // pred_check_branch
      %55 = sbr.rel (0) target = $region33
    $region32: #{_encoder_padded.1} parent=1 // pred_region
      %57 = dma.done [#allocation6], 4096
    $region33: #{_encoder_padded.1} parent=1 // pred_fallthru
      _
    %v58 = vld [vmem:[%s0] sm:$0xff]
    %v59 = vld [vmem:[#allocation2] sm:$0xff]
    %v60 = vld [vmem:[#allocation2 + $0x8] sm:$0xff]
    %v61 = vld [vmem:[#allocation2 + $0x10] sm:$0xff]
    %v62 = vld [vmem:[#allocation2 + $0x18] sm:$0xff]
    %v63 = vld [vmem:[#allocation2 + $0x20] sm:$0xff]
    %v64 = vld [vmem:[#allocation2 + $0x28] sm:$0xff]
    %v65 = vld [vmem:[#allocation2 + $0x30] sm:$0xff]
    %v66 = vld [vmem:[#allocation2 + $0x38] sm:$0xff]
    %v67 = vld [vmem:[#allocation2 + $0x40] sm:$0xff]
    %v68 = vld [vmem:[#allocation2 + $0x48] sm:$0xff]
    %v69 = vld [vmem:[#allocation2 + $0x50] sm:$0xff]
    %v70 = vld [vmem:[#allocation2 + $0x58] sm:$0xff]
    %v71 = vld [vmem:[#allocation2 + $0x60] sm:$0xff]
    %v72 = vld [vmem:[#allocation2 + $0x68] sm:$0xff]
    %v73 = vld [vmem:[#allocation2 + $0x70] sm:$0xff]
    %v74 = vld [vmem:[#allocation2 + $0x78] sm:$0xff]
    %v75 = vld [vmem:[%s2] sm:$0x1]
    %v77 = vperm.slane %v75, 0
    %79 = vmatpush.msra.mxu0 %v74
    %80 = vmatpush.msra.mxu0 %v73
    %81 = vmatpush.msra.mxu0 %v72
    %82 = vmatpush.msra.mxu0 %v71
    %83 = vmatpush.msra.mxu0 %v70
    %84 = vmatpush.msra.mxu0 %v69
    %85 = vmatpush.msra.mxu0 %v68
    %86 = vmatpush.msra.mxu0 %v67
    %87 = vmatpush.msra.mxu0 %v66
    %88 = vmatpush.msra.mxu0 %v65
    %89 = vmatpush.msra.mxu0 %v64
    %90 = vmatpush.msra.mxu0 %v63
    %91 = vmatpush.msra.mxu0 %v62
    %92 = vmatpush.msra.mxu0 %v61
    %93 = vmatpush.msra.mxu0 %v60
    %94 = vmatpush.msra.mxu0 %v59
    %95 = vmatmul.f32.gmra.mxu0 %v58
    %v96 = vpop.f32.mrf.mxu0
    %v97 = vadd.f32 %v77, %v96
    %98 = vdwg.mxu0
    %v99 = vmax.f32 %v97, 0.0
    %v100 = vld [vmem:[#allocation5] sm:$0xff]
    %v101 = vld [vmem:[#allocation5 + $0x8] sm:$0xff]
    %v102 = vld [vmem:[#allocation5 + $0x10] sm:$0xff]
    %v103 = vld [vmem:[#allocation5 + $0x18] sm:$0xff]
    %v104 = vld [vmem:[#allocation5 + $0x20] sm:$0xff]
    %v105 = vld [vmem:[#allocation5 + $0x28] sm:$0xff]
    %v106 = vld [vmem:[#allocation5 + $0x30] sm:$0xff]
    %v107 = vld [vmem:[#allocation5 + $0x38] sm:$0xff]
    %v108 = vld [vmem:[#allocation5 + $0x40] sm:$0xff]
    %v109 = vld [vmem:[#allocation5 + $0x48] sm:$0xff]
    %v110 = vld [vmem:[#allocation5 + $0x50] sm:$0xff]
    %v111 = vld [vmem:[#allocation5 + $0x58] sm:$0xff]
    %v112 = vld [vmem:[#allocation5 + $0x60] sm:$0xff]
    %v113 = vld [vmem:[#allocation5 + $0x68] sm:$0xff]
    %v114 = vld [vmem:[#allocation5 + $0x70] sm:$0xff]
    %v115 = vld [vmem:[#allocation5 + $0x78] sm:$0xff]
    %v116 = vld [vmem:[#allocation5 + $0x80] sm:$0xff]
    %v117 = vld [vmem:[#allocation5 + $0x88] sm:$0xff]
    %v118 = vld [vmem:[#allocation5 + $0x90] sm:$0xff]
    %v119 = vld [vmem:[#allocation5 + $0x98] sm:$0xff]
    %v120 = vld [vmem:[#allocation5 + $0xa0] sm:$0xff]
    %v121 = vld [vmem:[#allocation5 + $0xa8] sm:$0xff]
    %v122 = vld [vmem:[#allocation5 + $0xb0] sm:$0xff]
    %v123 = vld [vmem:[#allocation5 + $0xb8] sm:$0xff]
    %v124 = vld [vmem:[#allocation5 + $0xc0] sm:$0xff]
    %v125 = vld [vmem:[#allocation5 + $0xc8] sm:$0xff]
    %v126 = vld [vmem:[#allocation5 + $0xd0] sm:$0xff]
    %v127 = vld [vmem:[#allocation5 + $0xd8] sm:$0xff]
    %v128 = vld [vmem:[#allocation5 + $0xe0] sm:$0xff]
    %v129 = vld [vmem:[#allocation5 + $0xe8] sm:$0xff]
    %v130 = vld [vmem:[#allocation5 + $0xf0] sm:$0xff]
    %v131 = vld [vmem:[#allocation5 + $0xf8] sm:$0xff]
    %v132 = vld [vmem:[%s4] sm:$0x3]
    %v134 = vperm.slane %v132, 0
    %v135 = vperm.slane %v132, 1
    %138 = vmatpush.msra.mxu0 %v130
    %139 = vmatpush.msra.mxu0 %v128
    %140 = vmatpush.msra.mxu0 %v126
    %141 = vmatpush.msra.mxu0 %v124
    %142 = vmatpush.msra.mxu0 %v122
    %143 = vmatpush.msra.mxu0 %v120
    %144 = vmatpush.msra.mxu0 %v118
    %145 = vmatpush.msra.mxu0 %v116
    %146 = vmatpush.msra.mxu0 %v114
    %147 = vmatpush.msra.mxu0 %v112
    %148 = vmatpush.msra.mxu0 %v110
    %149 = vmatpush.msra.mxu0 %v108
    %150 = vmatpush.msra.mxu0 %v106
    %151 = vmatpush.msra.mxu0 %v104
    %152 = vmatpush.msra.mxu0 %v102
    %153 = vmatpush.msra.mxu0 %v100
    %154 = vmatmul.f32.gmra.mxu0 %v99
    %v155 = vpop.f32.mrf.mxu0
    %v156 = vadd.f32 %v134, %v155
    %157 = vdwg.mxu0
    %158 = vmatpush.msra.mxu0 %v131
    %159 = vmatpush.msra.mxu0 %v129
    %160 = vmatpush.msra.mxu0 %v127
    %161 = vmatpush.msra.mxu0 %v125
    %162 = vmatpush.msra.mxu0 %v123
    %163 = vmatpush.msra.mxu0 %v121
    %164 = vmatpush.msra.mxu0 %v119
    %165 = vmatpush.msra.mxu0 %v117
    %166 = vmatpush.msra.mxu0 %v115
    %167 = vmatpush.msra.mxu0 %v113
    %168 = vmatpush.msra.mxu0 %v111
    %169 = vmatpush.msra.mxu0 %v109
    %170 = vmatpush.msra.mxu0 %v107
    %171 = vmatpush.msra.mxu0 %v105
    %172 = vmatpush.msra.mxu0 %v103
    %173 = vmatpush.msra.mxu0 %v101
    %174 = vmatmul.f32.gmra.mxu0 %v99
    %v175 = vpop.f32.mrf.mxu0
    %v176 = vadd.f32 %v135, %v175
    %177 = vdwg.mxu0
    %v178 = vmul.f32 %v176, 1.442695
    %v179 = vpow.pop %v178
    %v180 = vld [vmem:[%s5] sm:$0xff]
    %v181 = vmul.f32 %v179, %v180
    %v182 = vadd.f32 %v156, %v181
    %183 = vst [vmem:[#allocation7] sm:$0xff] %v182
    %v184 = vlaneseq
    %v185 = vshrl.u32 %v184, 7
    %s186 = smul.u32 0, 8
    %v187 = vstv %s186
    %v188 = vadd.s32 %v185, %v187
    %v189 = vlaneseq
    %v190 = vand.u32 %v189, 127
    %vm191 = vcmp.lt.s32.totalorder %v188, 2
    %vm192 = vcmp.lt.s32.totalorder %v190, 2
    %vm193 = vmand %vm191, %vm192
    %v194 = vmul.f32 %v179, %v179
    %v195 = vmul.f32 %v156, %v156
    %v196 = vadd.f32 %v194, %v195
    %v197 = vsub.f32 %v196, %v176
    %v198 = vsub.f32 %v197, 0.5
    %v199 = vsel %vm193, %v198, 0.0
    %v200 = vadd.f32 %v199, 0.0
    %201 = vst [vmem:[%s7] sm:$0xff] %v200
    // Predicated region
    $region34: #{_encoder_padded.1} parent=1 // pred_check
      _
    $region35: #{_encoder_padded.1} parent=1 // pred_check_branch
      %203 = sbr.rel (0) target = $region37
    $region36: #{_encoder_padded.1} parent=1 // pred_region
      %205 = vsyncadd [#allocation4], 0
      %s207 = sshll.u32 [#allocation7], 4
      %s208 = int_to_ptr.vmem [resolvable:$true] %s207
      %s209 = sshll.u32 %s6, 4
      %s210 = int_to_ptr.hbm [resolvable:$true] %s209
      %212 = dma.vmem_to_hbm [thread:$0]  %s208, 128, %s210, [#allocation4]
    $region37: #{_encoder_padded.1} parent=1 // pred_fallthru
      _
    // Predicated region
    $region38: #{_encoder_padded.1} parent=1 // pred_check
      _
    $region39: #{_encoder_padded.1} parent=1 // pred_check_branch
      %214 = sbr.rel (0) target = $region41
    $region40: #{_encoder_padded.1} parent=1 // pred_region
      _
    $region41: #{_encoder_padded.1} parent=1 // pred_fallthru
      _
    // Predicated region
    $region42: #{_encoder_padded.1} parent=1 // pred_check
      _
    $region43: #{_encoder_padded.1} parent=1 // pred_check_branch
      %216 = sbr.rel (0) target = $region45
    $region44: #{_encoder_padded.1} parent=1 // pred_region
      %218 = dma.done [#allocation4], 128
    $region45: #{_encoder_padded.1} parent=1 // pred_fallthru
      _
    // Predicated region
    $region46: #{_encoder_padded.1} parent=1 // pred_check
      _
    $region47: #{_encoder_padded.1} parent=1 // pred_check_branch
      %220 = sbr.rel (0) target = $region49
    $region48: #{_encoder_padded.1} parent=1 // pred_region
      _
    $region49: #{_encoder_padded.1} parent=1 // pred_fallthru
      _
    %221 = vsyncpa [#allocation3], 1
    %222 = vsyncpa [#allocation6], 1
    %223 = vsyncpa [#allocation4], 1

</llo_original>
